<compile_context>
chip_gen: v7x
topology: tpu7x:2x2x1
jax: 0.10.0
libtpu: 0.0.40
codegen_flags: <defaults>
</compile_context>

<pallas_src>
import jax
import jax.numpy as jnp
from jax.experimental import pallas as pl
from jax.experimental.pallas import tpu as pltpu

_LANE_WIDTH = 1024        # 8 vregs wide; lane-dense last dim (multiple of 128)
_SUBLANES = 8             # f32 sublane count
_MAX_BLOCK_ROWS = 512     # 512 x 1024 f32 = 2 MiB/tile; 2x(in+out) ~ 8 MiB VMEM
_SMALL_FALLBACK = 64 * 1024   # below this, pallas_call fixed cost dominates


def _leaky_matmul_kernel(w_ref, x_ref, o_ref):
    # w_ref: (1,) in SMEM  -- the learned weight (K == 1 assumption)
    # x_ref: (block_rows, 1024) in VMEM (lane-dense tile of the flattened input)
    # o_ref: (block_rows, 1024) in VMEM
    slope = w_ref[0].astype(jnp.float32)             # scalar on the sreg path
    x = x_ref[...].astype(jnp.float32)               # in-kernel upcast (bf16-safe)
    v1 = x * slope                                    # v1 = x1 @ weight.T (K == 1)
    o_ref[...] = jnp.where(v1 > 0, v1, v1 * slope).astype(o_ref.dtype)


def _choose_block_rows(n_rows):
    """Pick a sublane-aligned block height; aim for >= 2 blocks (v7x 2 TCs)."""
    if n_rows <= _SUBLANES:
        return n_rows                                 # single block == full extent
    half = -(-n_rows // 2)                            # ceil(n_rows / 2)
    half = -(-half // _SUBLANES) * _SUBLANES          # round up to sublane multiple
    return min(_MAX_BLOCK_ROWS, half)


def model_forward(x1, weight, *, min_pallas_elements=_SMALL_FALLBACK):
    """Pallas implementation of Model.forward.

    x1:     (M, 1) float array  (K must be 1 since weight has a single element)
    weight: (1,)   float array
    returns (M,)   array  (matches torch.matmul((M,1), (1,)) -> (M,))
    """
    M, K = x1.shape
    assert K == 1, "weight has a single element, so the torch matmul requires K == 1"

    out_dtype = jnp.promote_types(x1.dtype, weight.dtype)
    w = weight.reshape(1)
    x_flat = x1.reshape(-1)                           # free reshape (contiguous)
    total = x_flat.shape[0]

    # Tiny problems: one-ish vreg of work; skip the kernel launch entirely.
    if total < min_pallas_elements:
        slope = w[0].astype(out_dtype)
        v1 = x_flat.astype(out_dtype) * slope
        return jnp.where(v1 > 0, v1, v1 * slope)

    # Pad only up to the next 1024-element slab so the 2-D reshape is legal.
    aligned = (total % _LANE_WIDTH) == 0
    if aligned:
        padded_total = total
        x_pad = x_flat                                # no copy at all
    else:
        padded_total = -(-total // _LANE_WIDTH) * _LANE_WIDTH
        x_pad = jnp.pad(x_flat, (0, padded_total - total))   # <= 1023 extra elems

    n_rows = padded_total // _LANE_WIDTH
    x2d = x_pad.reshape(n_rows, _LANE_WIDTH)

    block_rows = _choose_block_rows(n_rows)
    grid = (pl.cdiv(n_rows, block_rows),)             # partial edge block handled by Pallas

    out2d = pl.pallas_call(
        _leaky_matmul_kernel,
        out_shape=jax.ShapeDtypeStruct((n_rows, _LANE_WIDTH), out_dtype),
        grid=grid,
        in_specs=[
            pl.BlockSpec(memory_space=pltpu.MemorySpace.SMEM),       # scalar weight
            pl.BlockSpec((block_rows, _LANE_WIDTH), lambda i: (i, 0)),
        ],
        out_specs=pl.BlockSpec((block_rows, _LANE_WIDTH), lambda i: (i, 0)),
        compiler_params=pltpu.CompilerParams(
            dimension_semantics=("parallel",)),       # megacore-shardable
    )(w, x2d)

    out_flat = out2d.reshape(-1)                      # free reshape
    if not aligned:
        out_flat = out_flat[:total]                   # only in the unaligned case
    return out_flat


def _reference(x1, weight):
    v1 = (x1 @ weight).astype(jnp.promote_types(x1.dtype, weight.dtype))  # (M,)
    return jnp.where(v1 > 0, v1, v1 * weight[0])


if __name__ == "__main__":
    key = jax.random.PRNGKey(0)
    weight = jnp.array([0.5], dtype=jnp.float32)      # exactly as in Model.__init__

    # 1) Small shape consistent with the module (K = 1, batch M = 8):
    #    takes the fused-XLA fast path (problem fits in one vreg).
    x_small = jax.random.normal(key, (8, 1), dtype=jnp.float32)
    out_small = jax.block_until_ready(model_forward(x_small, weight))
    ref_small = _reference(x_small, weight)
    assert out_small.shape == ref_small.shape == (8,)
    assert jnp.allclose(out_small, ref_small, atol=1e-6)

    # 2) Aligned case (M % 1024 == 0): Pallas kernel, zero pad / zero slice.
    x_aligned = jax.random.normal(jax.random.fold_in(key, 1), (4096, 1), jnp.float32)
    out_aligned = jax.block_until_ready(
        model_forward(x_aligned, weight, min_pallas_elements=0))
    assert jnp.allclose(out_aligned, _reference(x_aligned, weight), atol=1e-6)

    # 3) Unaligned case: Pallas kernel with a partial edge block (masked writes).
    x_ragged = jax.random.normal(jax.random.fold_in(key, 2), (5000, 1), jnp.float32)
    out_ragged = jax.block_until_ready(
        model_forward(x_ragged, weight, min_pallas_elements=0))
    assert out_ragged.shape == (5000,)
    assert jnp.allclose(out_ragged, _reference(x_ragged, weight), atol=1e-6)

    print("KERNEL_OK")
</pallas_src>

<mosaic_0001>
module attributes {stable_mosaic.version = 11 : i64} {
  func.func @_leaky_matmul_kernel(%arg0: i32, %arg1: memref<1xf32, #tpu.memory_space<smem>>, %arg2: memref<4x1024xf32, #tpu.memory_space<vmem>>, %arg3: memref<4x1024xf32, #tpu.memory_space<vmem>>) attributes {dimension_semantics = [#tpu.dimension_semantics<parallel>], iteration_bounds = array<i64: 1>, scalar_prefetch = 0 : i64, scratch_operands = 0 : i64, tpu.core_type = #tpu.core_type<tc>, window_params = [{transform_indices = @transform_0, window_bounds = array<i64: 1>}, {transform_indices = @transform_1, window_bounds = array<i64: 4, 1024>}, {transform_indices = @transform_2, window_bounds = array<i64: 4, 1024>}]} {
    %c0 = arith.constant 0 : index
    %0 = memref.load %arg1[%c0] : memref<1xf32, #tpu.memory_space<smem>>
    %c0_0 = arith.constant 0 : index
    %c0_1 = arith.constant 0 : index
    %1 = vector.load %arg2[%c0_0, %c0_1] : memref<4x1024xf32, #tpu.memory_space<vmem>>, vector<4x1024xf32>
    %2 = vector.broadcast %0 : f32 to vector<4x1024xf32>
    %3 = arith.mulf %1, %2 : vector<4x1024xf32>
    %cst = arith.constant 0.000000e+00 : f32
    %4 = vector.broadcast %cst : f32 to vector<4x1024xf32>
    %5 = arith.cmpf ogt, %3, %4 : vector<4x1024xf32>
    %6 = vector.broadcast %0 : f32 to vector<4x1024xf32>
    %7 = arith.mulf %3, %6 : vector<4x1024xf32>
    %8 = arith.select %5, %3, %7 : vector<4x1024xi1>, vector<4x1024xf32>
    %c0_2 = arith.constant 0 : index
    %c0_3 = arith.constant 0 : index
    %9 = vector.load %arg3[%c0_2, %c0_3] : memref<4x1024xf32, #tpu.memory_space<vmem>>, vector<4x1024xf32>
    tpu.vector_store %arg3[%c0_2, %c0_3], %8 {strides = array<i32>} : memref<4x1024xf32, #tpu.memory_space<vmem>>, vector<4x1024xf32>,
    return
  }
  func.func @transform_0(%arg0: i32) -> i32 {
    %c0_i32 = arith.constant 0 : i32
    %c0_i32_0 = arith.constant 0 : i32
    return %c0_i32 : i32
  }
  func.func @transform_1(%arg0: i32) -> (i32, i32) {
    %c0_i32 = arith.constant 0 : i32
    %c0_i32_0 = arith.constant 0 : i32
    return %arg0, %c0_i32 : i32, i32
  }
  func.func @transform_2(%arg0: i32) -> (i32, i32) {
    %c0_i32 = arith.constant 0 : i32
    %c0_i32_0 = arith.constant 0 : i32
    return %arg0, %c0_i32 : i32, i32
  }
}

</mosaic_0001>

<llo_original>
// kernel: tpu_custom_call.1
$region0: #{tpu_custom_call.1}
  #allocation0 [shape = 'u32[]', space=smem, size = 0x4, offset = 0x4, fixed_abs, tag = 'smem constant byte address 0x4 - core index']
  #allocation1 [shape = 'u32[144,128]{1,0:T(1,128)}', space=vmem, size = 0x12000, scoped, tag = 'internal scratch']
  #allocation2 [shape = 'f32[1]{0:T(128)S(6)}', space=smem, size = 0x200, scoped, tag = 'scoped memory for tpu_custom_call.1']
  %s0 = inlined_call_operand.<no memory space> [shape: f32[1], index: 0, kind: input, shape index: {}]
  %s1 = inlined_call_operand.hbm [shape: f32[4,1024], index: 1, kind: input, shape index: {}]
  %s2 = inlined_call_operand.hbm [shape: f32[4,1024], index: 2, kind: output, shape index: {}]
  %s3 = sld [smem:[#allocation0]]
  $region22: #{tpu_custom_call.1} parent=0
    _
  %s5 = ssub.s32 1, %s3
  %s6 = scalar_select 0, %s5, %s3
  %7 = sst [smem:[#allocation2]] %s0
  $region1: #{tpu_custom_call.1} parent=0
    #allocation3 [shape = 'u8[16384]{0}', space=vmem, size = 0x4000, scoped, tag = 'input window, operand 1, single buffered']
    #allocation4 [shape = 's32[1]{0}', space=sflag, size = 0x4, scoped, tag = 'scoped memory for tpu_custom_call.1']
    #allocation5 [shape = 's32[1]{0}', space=sflag, size = 0x4, scoped, tag = 'scoped memory for tpu_custom_call.1']
    #allocation6 [shape = 'u8[16384]{0}', space=vmem, size = 0x4000, scoped, tag = 'output window, operand 0, single buffered']
    %8 = vsyncpa [#allocation4], 0
    %9 = vsyncpa [#allocation5], 0
    // Predicated region
    $region2: #{tpu_custom_call.1} parent=1 // pred_check
      _
    $region3: #{tpu_custom_call.1} parent=1 // pred_check_branch
      %11 = sbr.rel (0) target = $region5
    $region4: #{tpu_custom_call.1} parent=1 // pred_region
      _
    $region5: #{tpu_custom_call.1} parent=1 // pred_fallthru
      _
    // Predicated region
    $region6: #{tpu_custom_call.1} parent=1 // pred_check
      _
    $region7: #{tpu_custom_call.1} parent=1 // pred_check_branch
      %13 = sbr.rel (0) target = $region9
    $region8: #{tpu_custom_call.1} parent=1 // pred_region
      %s15 = ssub.s32 512, 512
      %16 = vsyncadd [#allocation4], %s15
      %s18 = sshll.u32 [#allocation3], 4
      %s19 = int_to_ptr.vmem [resolvable:$true] %s18
      %21 = dma.hbm_to_vmem [thread:$0]  %s1, 512, %s19, [#allocation4]
    $region9: #{tpu_custom_call.1} parent=1 // pred_fallthru
      _
    // Predicated region
    $region10: #{tpu_custom_call.1} parent=1 // pred_check
      _
    $region11: #{tpu_custom_call.1} parent=1 // pred_check_branch
      %23 = sbr.rel (0) target = $region13
    $region12: #{tpu_custom_call.1} parent=1 // pred_region
      %24 = dma.done [#allocation4], 512
    $region13: #{tpu_custom_call.1} parent=1 // pred_fallthru
      _
    %s25 = sld [smem:[#allocation2]]
    %v26 = vld [vmem:[#allocation3] sm:$0xff]
    %v27 = vld [vmem:[#allocation3 + $0x8] sm:$0xff]
    %v28 = vld [vmem:[#allocation3 + $0x10] sm:$0xff]
    %v29 = vld [vmem:[#allocation3 + $0x18] sm:$0xff]
    %v30 = vstv %s25
    %v31 = vmul.f32 %v26, %v30
    %v32 = vmul.f32 %v27, %v30
    %v33 = vmul.f32 %v28, %v30
    %v34 = vmul.f32 %v29, %v30
    %vm35 = vcmp.gt.f32.partialorder %v31, 0.0
    %vm36 = vcmp.gt.f32.partialorder %v32, 0.0
    %vm37 = vcmp.gt.f32.partialorder %v33, 0.0
    %vm38 = vcmp.gt.f32.partialorder %v34, 0.0
    %v39 = vmul.f32 %v31, %v30
    %v40 = vmul.f32 %v32, %v30
    %v41 = vmul.f32 %v33, %v30
    %v42 = vmul.f32 %v34, %v30
    %v43 = vsel %vm35, %v31, %v39
    %v44 = vsel %vm36, %v32, %v40
    %v45 = vsel %vm37, %v33, %v41
    %v46 = vsel %vm38, %v34, %v42
    %47 = vst [vmem:[#allocation6] sm:$0xff] %v43
    %48 = vst [vmem:[#allocation6 + $0x8] sm:$0xff] %v44
    %49 = vst [vmem:[#allocation6 + $0x10] sm:$0xff] %v45
    %50 = vst [vmem:[#allocation6 + $0x18] sm:$0xff] %v46
    // Predicated region
    $region14: #{tpu_custom_call.1} parent=1 // pred_check
      _
    $region15: #{tpu_custom_call.1} parent=1 // pred_check_branch
      %52 = sbr.rel (0) target = $region17
    $region16: #{tpu_custom_call.1} parent=1 // pred_region
      %s54 = ssub.s32 512, 512
      %55 = vsyncadd [#allocation5], %s54
      %s57 = sshll.u32 [#allocation6], 4
      %s58 = int_to_ptr.vmem [resolvable:$true] %s57
      %60 = dma.vmem_to_hbm [thread:$0]  %s58, 512, %s2, [#allocation5]
    $region17: #{tpu_custom_call.1} parent=1 // pred_fallthru
      _
    // Predicated region
    $region18: #{tpu_custom_call.1} parent=1 // pred_check
      _
    $region19: #{tpu_custom_call.1} parent=1 // pred_check_branch
      %62 = sbr.rel (0) target = $region21
    $region20: #{tpu_custom_call.1} parent=1 // pred_region
      %63 = dma.done [#allocation5], 512
    $region21: #{tpu_custom_call.1} parent=1 // pred_fallthru
      _
    %64 = vsyncpa [#allocation4], 1
    %65 = vsyncpa [#allocation5], 1

</llo_original>
